<compile_context>
chip_gen: v7x
topology: tpu7x:2x2x1
jax: 0.10.0
libtpu: 0.0.40
codegen_flags: <defaults>
</compile_context>

<pallas_src>
import jax
import jax.numpy as jnp
from jax.experimental import pallas as pl
from jax.experimental.pallas import tpu as pltpu


_EPS = 1e-5  # torch.nn.InstanceNorm2d default eps

# dtype-aware sublane multiple (f32 -> 8, bf16/f16 -> 16, int8/fp8 -> 32)
_SUBLANE = {4: 8, 2: 16, 1: 32}


def _make_kernel(hw_true, hw_pad):
    """Builds the kernel for blocks of shape (bb, bc, hw_pad); mask blocks are
    (bb, 1, hw_pad) or (bb, bc, hw_pad)."""
    n_pad = hw_pad - hw_true
    inv_hw = 1.0 / float(hw_true)

    def kernel(x_ref, m_ref, o_ref):
        x = x_ref[...].astype(jnp.float32)
        m = m_ref[...].astype(jnp.float32)

        # Shared lane (last-dim) reductions: 3 sums instead of the naive 6.
        # Zero-padded lanes (x = 0, m = 0) contribute nothing to these.
        sum_m = jnp.sum(m, axis=-1, keepdims=True)
        sum_x = jnp.sum(x, axis=-1, keepdims=True)
        sum_xm = jnp.sum(x * m, axis=-1, keepdims=True)

        # num_pixels with the torch `num_pixels[num_pixels == 0] = 1` fixup.
        npix_fg = jnp.where(sum_m == 0.0, 1.0, sum_m)
        sum_m_bg = float(hw_true) - sum_m
        npix_bg = jnp.where(sum_m_bg == 0.0, 1.0, sum_m_bg)

        mu_fg = sum_xm / npix_fg
        mu_bg = (sum_x - sum_xm) / npix_bg

        # mean(region + (1-mask)*mu) == mu, so the centered InstanceNorm input
        # is region - mask*mu = mask * (x - mu).  Centered two-pass variance
        # keeps numerics aligned with the PyTorch reference.
        c_fg = m * (x - mu_fg)
        c_bg = (1.0 - m) * (x - mu_bg)

        var_fg = jnp.sum(c_fg * c_fg, axis=-1, keepdims=True) * inv_hw
        raw_bg = jnp.sum(c_bg * c_bg, axis=-1, keepdims=True)
        if n_pad:
            # Each zero-padded lane contributes (0 - mu_bg)^2 to the bg sum;
            # remove that analytically (per-row scalar work, ~free).
            raw_bg = raw_bg - float(n_pad) * (mu_bg * mu_bg)
        var_bg = raw_bg * inv_hw

        scale_fg = jax.lax.rsqrt(var_fg + _EPS) * jnp.sqrt(npix_fg * inv_hw)
        scale_bg = jax.lax.rsqrt(var_bg + _EPS) * jnp.sqrt(npix_bg * inv_hw)

        # Fused output: out = x*a - b  (3 FMAs/element).  Algebraically equal
        # to c_fg*scale_fg + c_bg*scale_bg but c_fg/c_bg are dead here, so two
        # full-block temporaries drop out of the live set.
        ds = scale_fg - scale_bg
        a = scale_bg + m * ds
        b = mu_bg * scale_bg + m * (mu_fg * scale_fg - mu_bg * scale_bg)
        o_ref[...] = (x * a - b).astype(o_ref.dtype)

    return kernel


def _vmem_capacity_bytes():
    """Physical per-core VMEM; conservative fallback if the query fails."""
    try:
        cap = getattr(pltpu.get_tpu_info(), "vmem_capacity_bytes", None)
        if cap:
            return int(cap)
    except Exception:
        pass
    return 64 * 1024 * 1024  # v7x physical — smallest among supported gens


def _pick_tiles(B, C, hw_pad, x_item, m_item, shared_mask, usable_bytes):
    """Choose (block_b, block_c) so the real per-step footprint fits the budget.

    Footprint per block element ~= 2x double-buffered x input + 2x
    double-buffered output (x dtype) + ~4 block-sized f32 temporaries
    (x cast, x*m, c_fg, c_bg); per-channel masks add their own block."""
    per_elem = 4 * x_item + 4 * 4
    if not shared_mask:
        per_elem += 2 * m_item
    max_rows = max(1, usable_bytes // (per_elem * hw_pad))

    sub = _SUBLANE.get(x_item, 8)
    if C <= max_rows:
        # Full channel dim (always a legal block dim); fold batches to keep the
        # DMAs / sublane tiles large when C is small.
        block_c = C
        block_b = max(1, min(B, max_rows // max(C, 1)))
    else:
        block_c = min(C, max(sub, (max_rows // sub) * sub))
        block_b = 1

    # Keep at least 2 grid steps when possible so both v7x TensorCores get
    # work and the DMA pipeline has something to overlap with.
    c_steps = pl.cdiv(C, block_c)
    if c_steps == 1 and B > 1 and block_b >= B:
        block_b = (B + 1) // 2

    return block_b, block_c


def mask_norm(x, mask):
    """MaskNorm forward.  x: [B, C, H, W]; mask: [B, 1, H, W] or [B, C, H, W].
    The mask may be float, bool or int8 (cast to f32 inside the kernel)."""
    B, C, H, W = x.shape
    hw = H * W
    hw_pad = ((hw + 127) // 128) * 128  # lane-dense last dim (unmasked vst)

    x3 = x.reshape(B, C, hw)
    mC = mask.shape[1]
    shared_mask = (mC == 1)
    m3 = mask.reshape(B, mC, hw)  # NOT broadcast to C channels in HBM

    if hw_pad != hw:
        pad = ((0, 0), (0, 0), (0, hw_pad - hw))
        x3 = jnp.pad(x3, pad)
        m3 = jnp.pad(m3, pad)

    x_item = jnp.dtype(x.dtype).itemsize
    m_item = jnp.dtype(mask.dtype).itemsize

    phys = _vmem_capacity_bytes()
    usable = min(phys // 2, 32 * 1024 * 1024)
    block_b, block_c = _pick_tiles(B, C, hw_pad, x_item, m_item, shared_mask,
                                   usable)

    # Grid order matters: channel blocks innermost so the shared mask block
    # index (depends only on the batch index) is constant across consecutive
    # steps and is not re-DMA'd.  Do not reorder to (C-blocks, B-blocks).
    grid = (pl.cdiv(B, block_b), pl.cdiv(C, block_c))

    x_spec = pl.BlockSpec((block_b, block_c, hw_pad), lambda b, c: (b, c, 0))
    if shared_mask:
        m_spec = pl.BlockSpec((block_b, 1, hw_pad), lambda b, c: (b, 0, 0))
    else:
        m_spec = pl.BlockSpec((block_b, block_c, hw_pad), lambda b, c: (b, c, 0))
    o_spec = pl.BlockSpec((block_b, block_c, hw_pad), lambda b, c: (b, c, 0))

    # Explicit, footprint-aware scoped-VMEM limit (raises v5e's 16 MiB default,
    # stays well under v7x's 64 MiB physical).
    m_rows = 1 if shared_mask else block_c
    footprint = ((4 * x_item + 16) * block_b * block_c * hw_pad
                 + (2 * m_item + 4) * block_b * m_rows * hw_pad)
    vmem_limit = int(min(max(usable, footprint) + (4 << 20), phys - (2 << 20)))

    out = pl.pallas_call(
        _make_kernel(hw, hw_pad),
        out_shape=jax.ShapeDtypeStruct((B, C, hw_pad), x.dtype),
        grid_spec=pl.GridSpec(
            grid=grid,
            in_specs=[x_spec, m_spec],
            out_specs=o_spec,
        ),
        compiler_params=pltpu.CompilerParams(
            dimension_semantics=("parallel", "parallel"),
            vmem_limit_bytes=vmem_limit,
        ),
    )(x3, m3)

    if hw_pad != hw:
        out = out[..., :hw]
    return out.reshape(B, C, H, W)


def _mask_norm_ref(x, mask):
    """Pure-JAX reference mirroring the PyTorch module exactly (f32 mask)."""
    B, C, H, W = x.shape

    def normalize_region(region, m):
        npix = jnp.sum(m, axis=(2, 3), keepdims=True)
        npix = jnp.where(npix == 0.0, 1.0, npix)
        mu = jnp.sum(region, axis=(2, 3), keepdims=True) / npix
        v = region + (1.0 - m) * mu
        mean = jnp.mean(v, axis=(2, 3), keepdims=True)
        var = jnp.mean((v - mean) ** 2, axis=(2, 3), keepdims=True)
        normed = (v - mean) / jnp.sqrt(var + _EPS)
        return normed * jnp.sqrt(npix / (H * W))

    fg = normalize_region(x * mask, mask)
    bg = normalize_region(x * (1.0 - mask), 1.0 - mask)
    return fg + bg


if __name__ == "__main__":
    key = jax.random.PRNGKey(0)
    kx, km, kx2, km2, km3 = jax.random.split(key, 5)

    # --- Test 1: typical usage, shared binary f32 mask, lane-dense HW -------
    B, C, H, W = 2, 4, 16, 16
    x = jax.random.normal(kx, (B, C, H, W), dtype=jnp.float32)
    mask = (jax.random.uniform(km, (B, 1, H, W)) > 0.5).astype(jnp.float32)
    out = jax.block_until_ready(mask_norm(x, mask))
    ref = _mask_norm_ref(x, mask)
    assert out.shape == (B, C, H, W)
    assert jnp.allclose(out, ref, rtol=1e-4, atol=1e-4), (
        f"max abs err (shared mask) = {jnp.max(jnp.abs(out - ref))}"
    )

    # --- Test 2: per-channel int8 mask + non-multiple-of-128 HW (pad path) --
    H2 = W2 = 14  # HW = 196 -> padded to 256 lanes
    x2 = jax.random.normal(kx2, (B, C, H2, W2), dtype=jnp.float32)
    mask_pc_bool = jax.random.uniform(km2, (B, C, H2, W2)) > 0.5
    out_pc = jax.block_until_ready(mask_norm(x2, mask_pc_bool.astype(jnp.int8)))
    ref_pc = _mask_norm_ref(x2, mask_pc_bool.astype(jnp.float32))
    assert jnp.allclose(out_pc, ref_pc, rtol=1e-4, atol=1e-4), (
        f"max abs err (per-channel int8 mask) = {jnp.max(jnp.abs(out_pc - ref_pc))}"
    )

    # --- Test 3: shared f32 mask with padded HW ------------------------------
    mask_sh = (jax.random.uniform(km3, (B, 1, H2, W2)) > 0.5).astype(jnp.float32)
    out_sh = jax.block_until_ready(mask_norm(x2, mask_sh))
    ref_sh = _mask_norm_ref(x2, mask_sh)
    assert jnp.allclose(out_sh, ref_sh, rtol=1e-4, atol=1e-4), (
        f"max abs err (shared mask, padded HW) = {jnp.max(jnp.abs(out_sh - ref_sh))}"
    )

    print("KERNEL_OK")
</pallas_src>

<mosaic_0001>
module attributes {stable_mosaic.version = 11 : i64} {
  func.func @kernel(%arg0: i32, %arg1: i32, %arg2: memref<1x4x256xf32, #tpu.memory_space<vmem>>, %arg3: memref<1x1x256xf32, #tpu.memory_space<vmem>>, %arg4: memref<1x4x256xf32, #tpu.memory_space<vmem>>) attributes {dimension_semantics = [#tpu.dimension_semantics<parallel>, #tpu.dimension_semantics<parallel>], iteration_bounds = array<i64: 2, 1>, scalar_prefetch = 0 : i64, scratch_operands = 0 : i64, tpu.core_type = #tpu.core_type<tc>, window_params = [{transform_indices = @transform_0, window_bounds = array<i64: 1, 4, 256>}, {transform_indices = @transform_1, window_bounds = array<i64: 1, 1, 256>}, {transform_indices = @transform_2, window_bounds = array<i64: 1, 4, 256>}]} {
    %c0 = arith.constant 0 : index
    %c0_0 = arith.constant 0 : index
    %c0_1 = arith.constant 0 : index
    %0 = vector.load %arg2[%c0, %c0_0, %c0_1] : memref<1x4x256xf32, #tpu.memory_space<vmem>>, vector<1x4x256xf32>
    %c0_2 = arith.constant 0 : index
    %c0_3 = arith.constant 0 : index
    %c0_4 = arith.constant 0 : index
    %1 = vector.load %arg3[%c0_2, %c0_3, %c0_4] : memref<1x1x256xf32, #tpu.memory_space<vmem>>, vector<1x1x256xf32>
    %cst = arith.constant dense<0.000000e+00> : vector<1x1xf32>
    %2 = vector.multi_reduction <add>, %1, %cst [2] : vector<1x1x256xf32> to vector<1x1xf32>
    %3 = vector.shape_cast %2 : vector<1x1xf32> to vector<1x1x1xf32>
    %cst_5 = arith.constant dense<0.000000e+00> : vector<1x4xf32>
    %4 = vector.multi_reduction <add>, %0, %cst_5 [2] : vector<1x4x256xf32> to vector<1x4xf32>
    %5 = vector.shape_cast %4 : vector<1x4xf32> to vector<1x4x1xf32>
    %6 = vector.broadcast %1 : vector<1x1x256xf32> to vector<1x4x256xf32>
    %7 = arith.mulf %0, %6 : vector<1x4x256xf32>
    %cst_6 = arith.constant dense<0.000000e+00> : vector<1x4xf32>
    %8 = vector.multi_reduction <add>, %7, %cst_6 [2] : vector<1x4x256xf32> to vector<1x4xf32>
    %9 = vector.shape_cast %8 : vector<1x4xf32> to vector<1x4x1xf32>
    %cst_7 = arith.constant 0.000000e+00 : f32
    %10 = vector.broadcast %cst_7 : f32 to vector<1x1x1xf32>
    %11 = arith.cmpf oeq, %3, %10 : vector<1x1x1xf32>
    %cst_8 = arith.constant 1.000000e+00 : f32
    %12 = vector.broadcast %cst_8 : f32 to vector<1x1x1xf32>
    %13 = arith.select %11, %12, %3 : vector<1x1x1xi1>, vector<1x1x1xf32>
    %cst_9 = arith.constant 2.560000e+02 : f32
    %14 = vector.broadcast %cst_9 : f32 to vector<1x1x1xf32>
    %15 = arith.subf %14, %3 : vector<1x1x1xf32>
    %cst_10 = arith.constant 0.000000e+00 : f32
    %16 = vector.broadcast %cst_10 : f32 to vector<1x1x1xf32>
    %17 = arith.cmpf oeq, %15, %16 : vector<1x1x1xf32>
    %cst_11 = arith.constant 1.000000e+00 : f32
    %18 = vector.broadcast %cst_11 : f32 to vector<1x1x1xf32>
    %19 = arith.select %17, %18, %15 : vector<1x1x1xi1>, vector<1x1x1xf32>
    %20 = vector.broadcast %13 : vector<1x1x1xf32> to vector<1x4x1xf32>
    %21 = arith.divf %9, %20 : vector<1x4x1xf32>
    %22 = arith.subf %5, %9 : vector<1x4x1xf32>
    %23 = vector.broadcast %19 : vector<1x1x1xf32> to vector<1x4x1xf32>
    %24 = arith.divf %22, %23 : vector<1x4x1xf32>
    %25 = vector.broadcast %21 : vector<1x4x1xf32> to vector<1x4x256xf32>
    %26 = arith.subf %0, %25 : vector<1x4x256xf32>
    %27 = vector.broadcast %1 : vector<1x1x256xf32> to vector<1x4x256xf32>
    %28 = arith.mulf %27, %26 : vector<1x4x256xf32>
    %cst_12 = arith.constant 1.000000e+00 : f32
    %29 = vector.broadcast %cst_12 : f32 to vector<1x1x256xf32>
    %30 = arith.subf %29, %1 : vector<1x1x256xf32>
    %31 = vector.broadcast %24 : vector<1x4x1xf32> to vector<1x4x256xf32>
    %32 = arith.subf %0, %31 : vector<1x4x256xf32>
    %33 = vector.broadcast %30 : vector<1x1x256xf32> to vector<1x4x256xf32>
    %34 = arith.mulf %33, %32 : vector<1x4x256xf32>
    %35 = arith.mulf %28, %28 : vector<1x4x256xf32>
    %cst_13 = arith.constant dense<0.000000e+00> : vector<1x4xf32>
    %36 = vector.multi_reduction <add>, %35, %cst_13 [2] : vector<1x4x256xf32> to vector<1x4xf32>
    %37 = vector.shape_cast %36 : vector<1x4xf32> to vector<1x4x1xf32>
    %cst_14 = arith.constant 3.906250e-03 : f32
    %38 = vector.broadcast %cst_14 : f32 to vector<1x4x1xf32>
    %39 = arith.mulf %37, %38 : vector<1x4x1xf32>
    %40 = arith.mulf %34, %34 : vector<1x4x256xf32>
    %cst_15 = arith.constant dense<0.000000e+00> : vector<1x4xf32>
    %41 = vector.multi_reduction <add>, %40, %cst_15 [2] : vector<1x4x256xf32> to vector<1x4xf32>
    %42 = vector.shape_cast %41 : vector<1x4xf32> to vector<1x4x1xf32>
    %cst_16 = arith.constant 3.906250e-03 : f32
    %43 = vector.broadcast %cst_16 : f32 to vector<1x4x1xf32>
    %44 = arith.mulf %42, %43 : vector<1x4x1xf32>
    %cst_17 = arith.constant 9.99999974E-6 : f32
    %45 = vector.broadcast %cst_17 : f32 to vector<1x4x1xf32>
    %46 = arith.addf %39, %45 : vector<1x4x1xf32>
    %47 = math.rsqrt %46 : vector<1x4x1xf32>
    %cst_18 = arith.constant 3.906250e-03 : f32
    %48 = vector.broadcast %cst_18 : f32 to vector<1x1x1xf32>
    %49 = arith.mulf %13, %48 : vector<1x1x1xf32>
    %50 = math.sqrt %49 : vector<1x1x1xf32>
    %51 = vector.broadcast %50 : vector<1x1x1xf32> to vector<1x4x1xf32>
    %52 = arith.mulf %47, %51 : vector<1x4x1xf32>
    %cst_19 = arith.constant 9.99999974E-6 : f32
    %53 = vector.broadcast %cst_19 : f32 to vector<1x4x1xf32>
    %54 = arith.addf %44, %53 : vector<1x4x1xf32>
    %55 = math.rsqrt %54 : vector<1x4x1xf32>
    %cst_20 = arith.constant 3.906250e-03 : f32
    %56 = vector.broadcast %cst_20 : f32 to vector<1x1x1xf32>
    %57 = arith.mulf %19, %56 : vector<1x1x1xf32>
    %58 = math.sqrt %57 : vector<1x1x1xf32>
    %59 = vector.broadcast %58 : vector<1x1x1xf32> to vector<1x4x1xf32>
    %60 = arith.mulf %55, %59 : vector<1x4x1xf32>
    %61 = arith.subf %52, %60 : vector<1x4x1xf32>
    %62 = vector.broadcast %1 : vector<1x1x256xf32> to vector<1x4x256xf32>
    %63 = vector.broadcast %61 : vector<1x4x1xf32> to vector<1x4x256xf32>
    %64 = arith.mulf %62, %63 : vector<1x4x256xf32>
    %65 = vector.broadcast %60 : vector<1x4x1xf32> to vector<1x4x256xf32>
    %66 = arith.addf %65, %64 : vector<1x4x256xf32>
    %67 = arith.mulf %24, %60 : vector<1x4x1xf32>
    %68 = arith.mulf %21, %52 : vector<1x4x1xf32>
    %69 = arith.mulf %24, %60 : vector<1x4x1xf32>
    %70 = arith.subf %68, %69 : vector<1x4x1xf32>
    %71 = vector.broadcast %1 : vector<1x1x256xf32> to vector<1x4x256xf32>
    %72 = vector.broadcast %70 : vector<1x4x1xf32> to vector<1x4x256xf32>
    %73 = arith.mulf %71, %72 : vector<1x4x256xf32>
    %74 = vector.broadcast %67 : vector<1x4x1xf32> to vector<1x4x256xf32>
    %75 = arith.addf %74, %73 : vector<1x4x256xf32>
    %76 = arith.mulf %0, %66 : vector<1x4x256xf32>
    %77 = arith.subf %76, %75 : vector<1x4x256xf32>
    %c0_21 = arith.constant 0 : index
    %c0_22 = arith.constant 0 : index
    %c0_23 = arith.constant 0 : index
    %78 = vector.load %arg4[%c0_21, %c0_22, %c0_23] : memref<1x4x256xf32, #tpu.memory_space<vmem>>, vector<1x4x256xf32>
    tpu.vector_store %arg4[%c0_21, %c0_22, %c0_23], %77 {strides = array<i32>} : memref<1x4x256xf32, #tpu.memory_space<vmem>>, vector<1x4x256xf32>,
    return
  }
  func.func @transform_0(%arg0: i32, %arg1: i32) -> (i32, i32, i32) {
    %c0_i32 = arith.constant 0 : i32
    %c0_i32_0 = arith.constant 0 : i32
    return %arg0, %arg1, %c0_i32 : i32, i32, i32
  }
  func.func @transform_1(%arg0: i32, %arg1: i32) -> (i32, i32, i32) {
    %c0_i32 = arith.constant 0 : i32
    %c0_i32_0 = arith.constant 0 : i32
    %c0_i32_1 = arith.constant 0 : i32
    return %arg0, %c0_i32, %c0_i32_0 : i32, i32, i32
  }
  func.func @transform_2(%arg0: i32, %arg1: i32) -> (i32, i32, i32) {
    %c0_i32 = arith.constant 0 : i32
    %c0_i32_0 = arith.constant 0 : i32
    return %arg0, %arg1, %c0_i32 : i32, i32, i32
  }
}

</mosaic_0001>

<llo_original>
// kernel: tpu_custom_call.1
$region0: #{tpu_custom_call.1}
  #allocation0 [shape = 'u32[]', space=smem, size = 0x4, offset = 0x4, fixed_abs, tag = 'smem constant byte address 0x4 - core index']
  #allocation1 [shape = 'u32[144,128]{1,0:T(1,128)}', space=vmem, size = 0x12000, scoped, tag = 'internal scratch']
  %s0 = inlined_call_operand.hbm [shape: f32[2,4,256], index: 0, kind: input, shape index: {}]
  %s1 = inlined_call_operand.hbm [shape: f32[2,1,256], index: 1, kind: input, shape index: {}]
  %s2 = inlined_call_operand.hbm [shape: f32[2,4,256], index: 2, kind: output, shape index: {}]
  %s3 = sld [smem:[#allocation0]]
  $region49: #{tpu_custom_call.1} parent=0
    _
  %s5 = ssub.s32 1, %s3
  %s6 = scalar_select 0, %s5, %s3
  $region1: #{tpu_custom_call.1} parent=0
    #allocation2 [shape = 'u8[8192]{0}', space=vmem, size = 0x2000, scoped, tag = 'input window, operand 0']
    #allocation3 [shape = 's32[2]{0}', space=sflag, size = 0x8, scoped, tag = 'scoped memory for tpu_custom_call.1']
    #allocation4 [shape = 's32[2]{0}', space=sflag, size = 0x8, scoped, tag = 'scoped memory for tpu_custom_call.1']
    #allocation5 [shape = 'u8[2048]{0}', space=vmem, size = 0x800, scoped, tag = 'input window, operand 1']
    #allocation6 [shape = 's32[2]{0}', space=sflag, size = 0x8, scoped, tag = 'scoped memory for tpu_custom_call.1']
    #allocation7 [shape = 'u8[8192]{0}', space=vmem, size = 0x2000, scoped, tag = 'output window, operand 0']
    %7 = vsyncpa [#allocation3], 0
    %s8 = scalar_lea.sflag [#allocation3], 1
    %9 = vsyncpa %s8, 0
    %10 = vsyncpa [#allocation6], 0
    %s11 = scalar_lea.sflag [#allocation6], 1
    %12 = vsyncpa %s11, 0
    %13 = vsyncpa [#allocation4], 0
    %s14 = scalar_lea.sflag [#allocation4], 1
    %15 = vsyncpa %s14, 0
    loop: start=0, step=1, limit=4
    $region2: #{tpu_custom_call.1} parent=1 // loop_pre_header
      _
    $region3: #{tpu_custom_call.1} parent=1 // loop_header
      %s17 = sphi 0, %s21
      %p18 = scmp.ge.s32.totalorder %s17, 4
      %s24 = sphi 0, %s36
      %s25 = sphi 0, %s32
      %s26 = sphi 0, %s24
      %s27 = sphi 0, %s25
      %s28 = sphi 0, %s26
      %s29 = sphi 0, %s27
      %s41 = sphi 0, %s43
      %s44 = sphi 0, %s41
      %s45 = sphi 0, %s44
      %s61 = sphi 0, %s45
      %s67 = sphi 0, %s69
      %s70 = sphi 0, %s67
      %s71 = sphi 0, %s70
      %s87 = sphi 0, %s71
      %s95 = sphi 0, %s97
      %s98 = sphi 0, %s95
      %s99 = sphi 0, %s98
      %s115 = sphi 0, %s99
    $region4: #{tpu_custom_call.1} parent=1 // loop_header_branch
      %20 = sbr.rel (%p18) target = $region8
    $region5: #{tpu_custom_call.1} parent=1 // loop_body
      %s22 = ssub.s32 %s17, 1
      %s23 = ssub.s32 %s17, 2
      %s30 = sadd.s32 1, %s25
      %p31 = scmp.ge.s32.totalorder %s30, 1
      %s32 = scalar_select %p31, 0, %s30
      %s33 = sadd.s32 1, %s24
      %s34 = scalar_select %p31, %s33, %s24
      %p35 = scmp.ge.s32.totalorder %s34, 2
      %s36 = scalar_select %p35, 0, %s34
      %s37 = ssub.s32 %s24, %s36
      %s38 = ssub.s32 %s25, %s32
      %s39 = sor.u32 %s37, %s38
      %p40 = scmp.eq.s32.totalorder %s39, 0
      %s42 = sadd.s32 %s41, 1
      %s43 = scalar_select %p40, %s41, %s42
      %p46 = pneg %p40
      %p47 = scmp.eq.s32.totalorder %s17, 1
      %p48 = por %p46, %p47
      %p49 = scmp.ne.s32.totalorder %s41, %s44
      %p50 = scmp.eq.s32.totalorder %s17, 0
      %p51 = por %p49, %p50
      %p52 = scmp.ne.s32.totalorder %s41, %s44
      %p53 = scmp.eq.s32.totalorder %s22, 1
      %p54 = por %p52, %p53
      %p55 = scmp.ne.s32.totalorder %s44, %s45
      %p56 = scmp.eq.s32.totalorder %s22, 0
      %p57 = por %p55, %p56
      %p58 = scmp.ne.s32.totalorder %s44, %s45
      %p59 = scmp.eq.s32.totalorder %s23, 1
      %p60 = por %p58, %p59
      %p62 = scmp.ne.s32.totalorder %s45, %s61
      %p63 = scmp.eq.s32.totalorder %s23, 0
      %p64 = por %p62, %p63
      %s65 = ssub.s32 %s24, %s36
      %p66 = scmp.eq.s32.totalorder %s65, 0
      %s68 = sadd.s32 %s67, 1
      %s69 = scalar_select %p66, %s67, %s68
      %p72 = pneg %p66
      %p73 = scmp.eq.s32.totalorder %s17, 1
      %p74 = por %p72, %p73
      %p75 = scmp.ne.s32.totalorder %s67, %s70
      %p76 = scmp.eq.s32.totalorder %s17, 0
      %p77 = por %p75, %p76
      %p78 = scmp.ne.s32.totalorder %s67, %s70
      %p79 = scmp.eq.s32.totalorder %s22, 1
      %p80 = por %p78, %p79
      %p81 = scmp.ne.s32.totalorder %s70, %s71
      %p82 = scmp.eq.s32.totalorder %s22, 0
      %p83 = por %p81, %p82
      %p84 = scmp.ne.s32.totalorder %s70, %s71
      %p85 = scmp.eq.s32.totalorder %s23, 1
      %p86 = por %p84, %p85
      %p88 = scmp.ne.s32.totalorder %s71, %s87
      %p89 = scmp.eq.s32.totalorder %s23, 0
      %p90 = por %p88, %p89
      %s91 = ssub.s32 %s24, %s36
      %s92 = ssub.s32 %s25, %s32
      %s93 = sor.u32 %s91, %s92
      %p94 = scmp.eq.s32.totalorder %s93, 0
      %s96 = sadd.s32 %s95, 1
      %s97 = scalar_select %p94, %s95, %s96
      %p100 = pneg %p94
      %p101 = scmp.eq.s32.totalorder %s17, 1
      %p102 = por %p100, %p101
      %p103 = scmp.ne.s32.totalorder %s95, %s98
      %p104 = scmp.eq.s32.totalorder %s17, 0
      %p105 = por %p103, %p104
      %p106 = scmp.ne.s32.totalorder %s95, %s98
      %p107 = scmp.eq.s32.totalorder %s22, 1
      %p108 = por %p106, %p107
      %p109 = scmp.ne.s32.totalorder %s98, %s99
      %p110 = scmp.eq.s32.totalorder %s22, 0
      %p111 = por %p109, %p110
      %p112 = scmp.ne.s32.totalorder %s98, %s99
      %p113 = scmp.eq.s32.totalorder %s23, 1
      %p114 = por %p112, %p113
      %p116 = scmp.ne.s32.totalorder %s99, %s115
      %p117 = scmp.eq.s32.totalorder %s23, 0
      %p118 = por %p116, %p117
      %p119 = scmp.le.s32.totalorder 1, %s17
      %p120 = scmp.lt.s32.totalorder %s17, 3
      %p121 = pnand %p119, %p120
      %p122 = pneg %p121
      // Predicated region
      $region9: #{tpu_custom_call.1} parent=5 // pred_check
        _
      $region10: #{tpu_custom_call.1} parent=5 // pred_check_branch
        %124 = sbr.rel (%p121) target = $region12
      $region11: #{tpu_custom_call.1} parent=5 // pred_region
        %s125 = ssub.s32 %s17, 1
      $region12: #{tpu_custom_call.1} parent=5 // pred_fallthru
        _
      %p126 = scmp.lt.s32.totalorder %s17, 2
      // Predicated region
      $region13: #{tpu_custom_call.1} parent=5 // pred_check
        %p127 = pneg %p126
      $region14: #{tpu_custom_call.1} parent=5 // pred_check_branch
        %129 = sbr.rel (%p127) target = $region16
      $region15: #{tpu_custom_call.1} parent=5 // pred_region
        // Predicated region
        $region17: #{tpu_custom_call.1} parent=15 // pred_check
          %p130 = pneg %p51
        $region18: #{tpu_custom_call.1} parent=15 // pred_check_branch
          %132 = sbr.rel (%p130) target = $region20
        $region19: #{tpu_custom_call.1} parent=15 // pred_region
          %s133 = sand.u32 %s41, 1
          %s134 = scalar_lea.sflag [#allocation3], %s133
          %s135 = sand.u32 %s41, 1
          %s136 = smul.addr %s135, 8
          %s137 = scalar_lea.vmem [#allocation2], %s136
          %s139 = ssub.s32 128, 128
          %140 = vsyncadd %s134, %s139
          %s141 = smul.addr %s25, 2
          %s142 = smul.addr %s24, 2
          %s143 = sadd.s32 %s141, %s142
          %s144 = smul.addr %s143, 64
          %s145 = scalar_lea.hbm %s0, %s144
          %s147 = sshll.u32 %s137, 4
          %s148 = int_to_ptr.vmem [resolvable:$true] %s147
          %150 = dma.hbm_to_vmem [thread:$0]  %s145, 128, %s148, %s134
        $region20: #{tpu_custom_call.1} parent=15 // pred_fallthru
          _
        // Predicated region
        $region21: #{tpu_custom_call.1} parent=15 // pred_check
          %p151 = pneg %p77
        $region22: #{tpu_custom_call.1} parent=15 // pred_check_branch
          %153 = sbr.rel (%p151) target = $region24
        $region23: #{tpu_custom_call.1} parent=15 // pred_region
          %s154 = sand.u32 %s67, 1
          %s155 = scalar_lea.sflag [#allocation6], %s154
          %s156 = sand.u32 %s67, 1
          %s157 = smul.addr %s156, 2
          %s158 = scalar_lea.vmem [#allocation5], %s157
          %s160 = ssub.s32 32, 32
          %161 = vsyncadd %s155, %s160
          %s162 = smul.addr %s24, 2
          %s163 = smul.addr %s162, 16
          %s164 = scalar_lea.hbm %s1, %s163
          %s166 = sshll.u32 %s158, 4
          %s167 = int_to_ptr.vmem [resolvable:$true] %s166
          %169 = dma.hbm_to_vmem [thread:$0]  %s164, 32, %s167, %s155
        $region24: #{tpu_custom_call.1} parent=15 // pred_fallthru
          _
      $region16: #{tpu_custom_call.1} parent=5 // pred_fallthru
        _
      %p170 = scmp.le.s32.totalorder 1, %s17
      %p171 = scmp.lt.s32.totalorder %s17, 3
      %p172 = pnand %p170, %p171
      %p173 = pneg %p172
      // Predicated region
      $region25: #{tpu_custom_call.1} parent=5 // pred_check
        _
      $region26: #{tpu_custom_call.1} parent=5 // pred_check_branch
        %175 = sbr.rel (%p172) target = $region28
      $region27: #{tpu_custom_call.1} parent=5 // pred_region
        %s176 = ssub.s32 %s17, 1
        %s177 = sand.u32 %s44, 1
        %s178 = scalar_lea.sflag [#allocation3], %s177
        %s179 = sand.u32 %s44, 1
        %s180 = smul.addr %s179, 8
        %s181 = scalar_lea.vmem [#allocation2], %s180
        // Predicated region
        $region29: #{tpu_custom_call.1} parent=27 // pred_check
          %p182 = pneg %p57
        $region30: #{tpu_custom_call.1} parent=27 // pred_check_branch
          %184 = sbr.rel (%p182) target = $region32
        $region31: #{tpu_custom_call.1} parent=27 // pred_region
          %185 = dma.done %s178, 128
        $region32: #{tpu_custom_call.1} parent=27 // pred_fallthru
          _
        %s186 = sand.u32 %s70, 1
        %s187 = scalar_lea.sflag [#allocation6], %s186
        %s188 = sand.u32 %s70, 1
        %s189 = smul.addr %s188, 2
        %s190 = scalar_lea.vmem [#allocation5], %s189
        // Predicated region
        $region33: #{tpu_custom_call.1} parent=27 // pred_check
          %p191 = pneg %p83
        $region34: #{tpu_custom_call.1} parent=27 // pred_check_branch
          %193 = sbr.rel (%p191) target = $region36
        $region35: #{tpu_custom_call.1} parent=27 // pred_region
          %194 = dma.done %s187, 32
        $region36: #{tpu_custom_call.1} parent=27 // pred_fallthru
          _
        %s195 = sand.u32 %s44, 1
        %s196 = scalar_lea.sflag [#allocation3], %s195
        %s197 = sand.u32 %s44, 1
        %s198 = smul.addr %s197, 8
        %s199 = scalar_lea.vmem [#allocation2], %s198
        %p200 = pneg %p57
        %p201 = pneg %p54
        %s202 = sand.u32 %s70, 1
        %s203 = scalar_lea.sflag [#allocation6], %s202
        %s204 = sand.u32 %s70, 1
        %s205 = smul.addr %s204, 2
        %s206 = scalar_lea.vmem [#allocation5], %s205
        %p207 = pneg %p83
        %p208 = pneg %p80
        %p209 = pneg %p111
        %p210 = pneg %p108
        %s211 = sand.u32 %s98, 1
        %s212 = scalar_lea.sflag [#allocation4], %s211
        %s213 = sand.u32 %s98, 1
        %s214 = smul.addr %s213, 8
        %s215 = scalar_lea.vmem [#allocation7], %s214
        %v216 = vld [vmem:[%s181] sm:$0xff]
        %v217 = vld [vmem:[%s190] sm:$0x3]
        %v219 = vlaneseq
        %v220 = vshrl.u32 %v219, 7
        %v221 = vsub.s32 0, %v220
        %v222 = vrot.slane %v217, %v221
        %v223 = vlaneseq
        %v224 = vshrl.u32 %v223, 7
        %v225 = vsub.s32 1, %v224
        %v226 = vrot.slane %v217, %v225
        %vm229 = vcmask 1040384
        %v230 = vsel %vm229, %v222, 0.0
        %v231 = vsel %vm229, %v226, 0.0
        %v232 = vadd.f32 %v230, %v231
        %233 = vadd.xlane.f32.xlu0 %v232
        %v234 = vpop.xlane.xlu0 %233
        %v236 = vcombine.high %v216, %v216
        %vm238 = vcmask 1043456
        %v239 = vsel %vm238, %v216, 0.0
        %v240 = vsel %vm238, %v236, 0.0
        %v241 = vadd.f32 %v239, %v240
        %242 = vadd.xlane.f32.xlu0 %v241
        %v243 = vpop.xlane.xlu0 %242
        %v244 = vcombine.low %v222, %v226
        %v246 = vmul.f32 %v216, %v244
        %v248 = vcombine.high %v246, %v246
        %v250 = vsel %vm238, %v246, 0.0
        %v251 = vsel %vm238, %v248, 0.0
        %v252 = vadd.f32 %v250, %v251
        %253 = vadd.xlane.f32.xlu0 %v252
        %v254 = vpop.xlane.xlu0 %253
        %vm255 = vcmp.eq.f32.partialorder %v234, 0.0
        %v256 = vsel %vm255, 1.0, %v234
        %v257 = vsub.f32 256.0, %v234
        %vm258 = vcmp.eq.f32.partialorder %v257, 0.0
        %v259 = vsel %vm258, 1.0, %v257
        %v260 = vlaneseq
        %v261 = vshrl.u32 %v260, 7
        %v262 = vsub.s32 0, %v261
        %v263 = vrot.slane %v256, %v262
        %v264 = vrcp.pop %v263
        %v265 = vmul.f32 %v254, %v264
        %v266 = vsub.f32 %v243, %v254
        %v267 = vlaneseq
        %v268 = vshrl.u32 %v267, 7
        %v269 = vsub.s32 0, %v268
        %v270 = vrot.slane %v259, %v269
        %v271 = vrcp.pop %v270
        %v272 = vmul.f32 %v266, %v271
        %v275 = vunpack.c.l.s4 839922192
        %v276 = vunpack.c.0.s8 %v275
        %v277 = vlaneseq
        %v278 = vshrl.u32 %v277, 7
        %v279 = vsub.s32 %v276, %v278
        %v280 = vrot.slane %v265, %v279
        %v282 = vsub.f32 %v216, %v280
        %v284 = vcombine.high %v282, %v282
        %v286 = vmul.f32 %v222, %v282
        %v287 = vmul.f32 %v226, %v284
        %v288 = vsub.f32 1.0, %v217
        %v291 = vunpack.c.l.s4 839922192
        %v292 = vunpack.c.0.s8 %v291
        %v293 = vlaneseq
        %v294 = vshrl.u32 %v293, 7
        %v295 = vsub.s32 %v292, %v294
        %v296 = vrot.slane %v272, %v295
        %v298 = vsub.f32 %v216, %v296
        %v300 = vlaneseq
        %v301 = vshrl.u32 %v300, 7
        %v302 = vsub.s32 0, %v301
        %v303 = vrot.slane %v288, %v302
        %v304 = vlaneseq
        %v305 = vshrl.u32 %v304, 7
        %v306 = vsub.s32 1, %v305
        %v307 = vrot.slane %v288, %v306
        %v311 = vcombine.high %v298, %v298
        %v313 = vmul.f32 %v303, %v298
        %v314 = vmul.f32 %v307, %v311
        %v315 = vmul.f32 %v286, %v286
        %v316 = vmul.f32 %v287, %v287
        %v317 = vsel %vm238, %v315, 0.0
        %v318 = vsel %vm238, %v316, 0.0
        %v319 = vadd.f32 %v317, %v318
        %320 = vadd.xlane.f32.xlu0 %v319
        %v321 = vpop.xlane.xlu0 %320
        %v322 = vmul.f32 %v321, 0.00390625
        %v323 = vmul.f32 %v313, %v313
        %v324 = vmul.f32 %v314, %v314
        %v325 = vsel %vm238, %v323, 0.0
        %v326 = vsel %vm238, %v324, 0.0
        %v327 = vadd.f32 %v325, %v326
        %328 = vadd.xlane.f32.xlu0 %v327
        %v329 = vpop.xlane.xlu0 %328
        %v330 = vmul.f32 %v329, 0.00390625
        %v331 = vadd.f32 %v322, 1e-05
        %v332 = vrsqrt.pop %v331
        %v333 = vmul.f32 %v256, 0.00390625
        %v334 = vrsqrt.pop %v333
        %v335 = vmul.f32 %v333, %v334
        %vm336 = vcmp.eq.f32.partialorder %v333, inf
        %v337 = vsel %vm336, %v333, %v335
        %vm338 = vcmp.eq.f32.partialorder %v333, 0.0
        %v339 = vand.u32 %v333, 2147483648
        %v340 = vsel %vm338, %v339, %v337
        %v341 = vlaneseq
        %v342 = vshrl.u32 %v341, 7
        %v343 = vsub.s32 0, %v342
        %v344 = vrot.slane %v340, %v343
        %v345 = vmul.f32 %v332, %v344
        %v346 = vadd.f32 %v330, 1e-05
        %v347 = vrsqrt.pop %v346
        %v348 = vmul.f32 %v259, 0.00390625
        %v349 = vrsqrt.pop %v348
        %v350 = vmul.f32 %v348, %v349
        %vm351 = vcmp.eq.f32.partialorder %v348, inf
        %v352 = vsel %vm351, %v348, %v350
        %vm353 = vcmp.eq.f32.partialorder %v348, 0.0
        %v354 = vand.u32 %v348, 2147483648
        %v355 = vsel %vm353, %v354, %v352
        %v356 = vlaneseq
        %v357 = vshrl.u32 %v356, 7
        %v358 = vsub.s32 0, %v357
        %v359 = vrot.slane %v355, %v358
        %v360 = vmul.f32 %v347, %v359
        %v361 = vsub.f32 %v345, %v360
        %v362 = vmul.f32 %v222, %v361
        %v363 = vmul.f32 %v226, %v361
        %v364 = vadd.f32 %v360, %v362
        %v365 = vadd.f32 %v360, %v363
        %v366 = vmul.f32 %v272, %v360
        %v367 = vmul.f32 %v265, %v345
        %v368 = vsub.f32 %v367, %v366
        %v369 = vmul.f32 %v222, %v368
        %v370 = vmul.f32 %v226, %v368
        %v371 = vadd.f32 %v366, %v369
        %v372 = vadd.f32 %v366, %v370
        %v375 = vcombine.low %v364, %v365
        %v377 = vmul.f32 %v216, %v375
        %v380 = vcombine.low %v371, %v372
        %v382 = vsub.f32 %v377, %v380
        %383 = vst [vmem:[%s215] sm:$0xff] %v382
        %s384 = sand.u32 %s98, 1
        %s385 = scalar_lea.sflag [#allocation4], %s384
        %s386 = sand.u32 %s98, 1
        %s387 = smul.addr %s386, 8
        %s388 = scalar_lea.vmem [#allocation7], %s387
        // Predicated region
        $region37: #{tpu_custom_call.1} parent=27 // pred_check
          %p389 = pneg %p108
        $region38: #{tpu_custom_call.1} parent=27 // pred_check_branch
          %391 = sbr.rel (%p389) target = $region40
        $region39: #{tpu_custom_call.1} parent=27 // pred_region
          %s393 = ssub.s32 128, 128
          %394 = vsyncadd %s385, %s393
          %s395 = smul.addr %s27, 2
          %s396 = smul.addr %s26, 2
          %s397 = sadd.s32 %s395, %s396
          %s398 = smul.addr %s397, 64
          %s399 = scalar_lea.hbm %s2, %s398
          %s401 = sshll.u32 %s388, 4
          %s402 = int_to_ptr.vmem [resolvable:$true] %s401
          %404 = dma.vmem_to_hbm [thread:$0]  %s402, 128, %s399, %s385
        $region40: #{tpu_custom_call.1} parent=27 // pred_fallthru
          _
      $region28: #{tpu_custom_call.1} parent=5 // pred_fallthru
        _
      %p405 = scmp.le.s32.totalorder 2, %s17
      // Predicated region
      $region41: #{tpu_custom_call.1} parent=5 // pred_check
        %p406 = pneg %p405
      $region42: #{tpu_custom_call.1} parent=5 // pred_check_branch
        %408 = sbr.rel (%p406) target = $region44
      $region43: #{tpu_custom_call.1} parent=5 // pred_region
        %s409 = ssub.s32 %s17, 2
        // Predicated region
        $region45: #{tpu_custom_call.1} parent=43 // pred_check
          %p410 = pneg %p114
        $region46: #{tpu_custom_call.1} parent=43 // pred_check_branch
          %412 = sbr.rel (%p410) target = $region48
        $region47: #{tpu_custom_call.1} parent=43 // pred_region
          %s413 = sand.u32 %s99, 1
          %s414 = scalar_lea.sflag [#allocation4], %s413
          %s415 = sand.u32 %s99, 1
          %s416 = smul.addr %s415, 8
          %s417 = scalar_lea.vmem [#allocation7], %s416
          %418 = dma.done %s414, 128
        $region48: #{tpu_custom_call.1} parent=43 // pred_fallthru
          _
      $region44: #{tpu_custom_call.1} parent=5 // pred_fallthru
        _
    $region6: #{tpu_custom_call.1} parent=1 // loop_footer
      %s21 = sadd.s32 1, %s17
    $region7: #{tpu_custom_call.1} parent=1 // loop_footer_branch
      %16 = sbr.rel target = $region3
    $region8: #{tpu_custom_call.1} parent=1 // loop_exit
      _
    %419 = vsyncpa [#allocation3], 1
    %s420 = scalar_lea.sflag [#allocation3], 1
    %421 = vsyncpa %s420, 1
    %422 = vsyncpa [#allocation6], 1
    %s423 = scalar_lea.sflag [#allocation6], 1
    %424 = vsyncpa %s423, 1
    %425 = vsyncpa [#allocation4], 1
    %s426 = scalar_lea.sflag [#allocation4], 1
    %427 = vsyncpa %s426, 1

</llo_original>
